<compile_context>
chip_gen: v6e
topology: v6e:2x2x1
jax: 0.10.0
libtpu: 0.0.40
codegen_flags: <defaults>
</compile_context>

<pallas_src>
import jax
import jax.numpy as jnp
from jax.experimental import pallas as pl
from jax.experimental.pallas import tpu as pltpu


def _round_up(x, m):
    return ((x + m - 1) // m) * m


def wordemb_skip_matmul_kernel(embed_ref, ctx_ref, out_ref):
    # embed_ref: VMEM (tile_n, emb_size) compute_dtype -- gathered word rows
    # ctx_ref:   VMEM (emb_size, tile_v) compute_dtype -- vocab tile of ctx
    # out_ref:   VMEM (tile_n, tile_v)  float32        -- output tile
    out_ref[...] = jnp.dot(
        embed_ref[...], ctx_ref[...],
        preferred_element_type=jnp.float32,
    ).astype(out_ref.dtype)


def wordemb_skip(word_ids, emb_table, ctx_emb, *,
                 tile_n=256, tile_v=1024, compute_dtype=jnp.bfloat16):
    """Forward pass of WordEmbSkip: Embedding(word) @ context_embedding."""
    N = word_ids.shape[0]
    nwords, emb_size = emb_table.shape
    assert ctx_emb.shape == (emb_size, nwords)

    # Clamp out-of-range ids (torch.nn.Embedding would raise instead).
    ids = jnp.clip(jnp.asarray(word_ids, jnp.int32), 0, nwords - 1)

    # Embedding lookup via XLA gather in the wrapper (perf-review option (a)).
    embed = jnp.take(emb_table, ids, axis=0).astype(compute_dtype)
    ctx = ctx_emb.astype(compute_dtype)

    # ---- tile selection --------------------------------------------------
    # Keep >=2 batch tiles when the batch allows it so the two TensorCores
    # (v7x megacore) can split the "parallel" batch axis.
    n_ceil = _round_up(N, 8)
    if n_ceil // 2 >= 8:
        tile_n = min(tile_n, _round_up(n_ceil // 2, 8))
    else:
        tile_n = min(tile_n, n_ceil)
    tile_n = max(8, _round_up(tile_n, 8))
    n_pad = _round_up(N, tile_n)

    v_ceil = _round_up(nwords, 128)
    tile_v = max(128, min(_round_up(tile_v, 128), v_ceil))
    v_pad = _round_up(nwords, tile_v)

    # ---- padding ----------------------------------------------------------
    if n_pad != N:
        embed = jnp.pad(embed, ((0, n_pad - N), (0, 0)))
    if v_pad != nwords:
        ctx = jnp.pad(ctx, ((0, 0), (0, v_pad - nwords)))

    grid = (n_pad // tile_n, v_pad // tile_v)
    csize = jnp.dtype(compute_dtype).itemsize

    # ---- VMEM budget (actual double-buffered tile footprint + headroom) ---
    vmem_needed = (2 * tile_n * emb_size * csize      # embed tile (pipelined)
                   + 2 * emb_size * tile_v * csize    # ctx tile   (pipelined)
                   + 2 * tile_n * tile_v * 4)         # out tile   (pipelined)
    try:
        vmem_cap = int(pltpu.get_tpu_info().vmem_capacity_bytes)
    except Exception:
        vmem_cap = 64 * 2**20                         # conservative (v7x)
    vmem_limit = int(min(int(0.9 * vmem_cap),
                         max(32 * 2**20, int(1.25 * vmem_needed))))

    cost = pl.CostEstimate(
        flops=2 * n_pad * emb_size * v_pad,
        transcendentals=0,
        bytes_accessed=(n_pad * emb_size * csize                  # embed read
                        + grid[0] * v_pad * emb_size * csize      # ctx re-stream
                        + n_pad * v_pad * 4),                     # out write
    )

    out = pl.pallas_call(
        wordemb_skip_matmul_kernel,
        out_shape=jax.ShapeDtypeStruct((n_pad, v_pad), jnp.float32),
        grid_spec=pltpu.PrefetchScalarGridSpec(
            num_scalar_prefetch=0,
            grid=grid,
            in_specs=[
                pl.BlockSpec((tile_n, emb_size), lambda i, j: (i, 0)),
                pl.BlockSpec((emb_size, tile_v), lambda i, j: (0, j)),
            ],
            out_specs=pl.BlockSpec((tile_n, tile_v), lambda i, j: (i, j)),
        ),
        compiler_params=pltpu.CompilerParams(
            dimension_semantics=("parallel", "parallel"),
            vmem_limit_bytes=vmem_limit,
        ),
        cost_estimate=cost,
    )(embed, ctx)

    return out[:N, :nwords]


if __name__ == "__main__":
    # Small synthetic shapes consistent with the module (ragged batch).
    nwords = 512      # vocabulary size
    emb_size = 128    # embedding dim
    N = 300           # batch of word ids (deliberately not tile-aligned)

    key = jax.random.PRNGKey(0)
    k_emb, k_ctx, k_ids = jax.random.split(key, 3)

    # torch.nn.init.uniform_(weight, -0.25, 0.25)
    emb_table = jax.random.uniform(
        k_emb, (nwords, emb_size), dtype=jnp.float32, minval=-0.25, maxval=0.25)
    # torch.randn(emb_size, nwords)
    ctx_emb = jax.random.normal(k_ctx, (emb_size, nwords), dtype=jnp.float32)
    # batch of word indices
    word_ids = jax.random.randint(k_ids, (N,), 0, nwords, dtype=jnp.int32)

    # Pure-JAX reference (torch float32 semantics).
    ref = jnp.take(emb_table, word_ids, axis=0) @ ctx_emb

    # f32 compute path: matches torch float32 semantics tightly.
    out_f32 = jax.block_until_ready(
        wordemb_skip(word_ids, emb_table, ctx_emb, compute_dtype=jnp.float32))
    assert out_f32.shape == (N, nwords)
    assert jnp.allclose(out_f32, ref, atol=1e-4, rtol=1e-4)

    # Default bf16 compute path (MXU-native on v6e/v7x, f32 accumulation).
    out_bf16 = jax.block_until_ready(wordemb_skip(word_ids, emb_table, ctx_emb))
    assert out_bf16.shape == (N, nwords)
    assert jnp.allclose(out_bf16, ref, atol=1e-1, rtol=5e-2)

    print("KERNEL_OK")
</pallas_src>

<mosaic_0001>
module attributes {stable_mosaic.version = 11 : i64} {
  func.func @wordemb_skip_matmul_kernel(%arg0: i32, %arg1: i32, %arg2: memref<152x128xf32, #tpu.memory_space<vmem>>, %arg3: memref<128x512xf32, #tpu.memory_space<vmem>>, %arg4: memref<152x512xf32, #tpu.memory_space<vmem>>) attributes {dimension_semantics = [#tpu.dimension_semantics<parallel>, #tpu.dimension_semantics<parallel>], iteration_bounds = array<i64: 2, 1>, scalar_prefetch = 0 : i64, scratch_operands = 0 : i64, tpu.core_type = #tpu.core_type<tc>, window_params = [{transform_indices = @transform_0, window_bounds = array<i64: 152, 128>}, {transform_indices = @transform_1, window_bounds = array<i64: 128, 512>}, {transform_indices = @transform_2, window_bounds = array<i64: 152, 512>}]} {
    %c0 = arith.constant 0 : index
    %c0_0 = arith.constant 0 : index
    %0 = vector.load %arg2[%c0, %c0_0] : memref<152x128xf32, #tpu.memory_space<vmem>>, vector<152x128xf32>
    %c0_1 = arith.constant 0 : index
    %c0_2 = arith.constant 0 : index
    %1 = vector.load %arg3[%c0_1, %c0_2] : memref<128x512xf32, #tpu.memory_space<vmem>>, vector<128x512xf32>
    %cst = arith.constant dense<0.000000e+00> : vector<152x512xf32>
    %2 = tpu.matmul %0, %1, %cst {dimension_numbers = #tpu.dot_dimension_numbers<[1], [0], [0], [1], [0, 0, 1, 1], [], []>} : vector<152x128xf32>, vector<128x512xf32>, vector<152x512xf32> -> vector<152x512xf32>
    %c0_3 = arith.constant 0 : index
    %c0_4 = arith.constant 0 : index
    %3 = vector.load %arg4[%c0_3, %c0_4] : memref<152x512xf32, #tpu.memory_space<vmem>>, vector<152x512xf32>
    tpu.vector_store %arg4[%c0_3, %c0_4], %2 {strides = array<i32>} : memref<152x512xf32, #tpu.memory_space<vmem>>, vector<152x512xf32>,
    return
  }
  func.func @transform_0(%arg0: i32, %arg1: i32) -> (i32, i32) {
    %c0_i32 = arith.constant 0 : i32
    %c0_i32_0 = arith.constant 0 : i32
    return %arg0, %c0_i32 : i32, i32
  }
  func.func @transform_1(%arg0: i32, %arg1: i32) -> (i32, i32) {
    %c0_i32 = arith.constant 0 : i32
    %c0_i32_0 = arith.constant 0 : i32
    return %c0_i32, %arg1 : i32, i32
  }
  func.func @transform_2(%arg0: i32, %arg1: i32) -> (i32, i32) {
    %c0_i32 = arith.constant 0 : i32
    return %arg0, %arg1 : i32, i32
  }
}

</mosaic_0001>

<llo_original>
// kernel: tpu_custom_call.1
$region0: #{tpu_custom_call.1}
  #allocation0 [shape = 'u32[]', space=smem, size = 0x4, offset = 0x4, fixed_abs, tag = 'smem constant byte address 0x4 - core index']
  #allocation1 [shape = 'u32[144,128]{1,0:T(1,128)}', space=vmem, size = 0x12000, scoped, tag = 'internal scratch']
  %s0 = inlined_call_operand.hbm [shape: f32[304,128], index: 0, kind: input, shape index: {}]
  %s1 = inlined_call_operand.hbm [shape: f32[128,512], index: 1, kind: input, shape index: {}]
  %s2 = inlined_call_operand.hbm [shape: f32[304,512], index: 2, kind: output, shape index: {}]
  %s3 = sld [smem:[#allocation0]]
  $region49: #{tpu_custom_call.1} parent=0
    _
  %s5 = ssub.s32 1, %s3
  %s6 = scalar_select 0, %s5, %s3
  $region1: #{tpu_custom_call.1} parent=0
    #allocation2 [shape = 'u8[155648]{0}', space=vmem, size = 0x26000, scoped, tag = 'input window, operand 0']
    #allocation3 [shape = 's32[2]{0}', space=sflag, size = 0x8, scoped, tag = 'scoped memory for tpu_custom_call.1']
    #allocation4 [shape = 's32[2]{0}', space=sflag, size = 0x8, scoped, tag = 'scoped memory for tpu_custom_call.1']
    #allocation5 [shape = 'u8[262144]{0}', space=vmem, size = 0x40000, scoped, tag = 'input window, operand 1, single buffered']
    #allocation6 [shape = 's32[1]{0}', space=sflag, size = 0x4, scoped, tag = 'scoped memory for tpu_custom_call.1']
    #allocation7 [shape = 'u8[622592]{0}', space=vmem, size = 0x98000, scoped, tag = 'output window, operand 0']
    %7 = vsyncpa [#allocation3], 0
    %s8 = scalar_lea.sflag [#allocation3], 1
    %9 = vsyncpa %s8, 0
    %10 = vsyncpa [#allocation6], 0
    %11 = vsyncpa [#allocation4], 0
    %s12 = scalar_lea.sflag [#allocation4], 1
    %13 = vsyncpa %s12, 0
    loop: start=0, step=1, limit=4
    $region2: #{tpu_custom_call.1} parent=1 // loop_pre_header
      _
    $region3: #{tpu_custom_call.1} parent=1 // loop_header
      %s15 = sphi 0, %s19
      %p16 = scmp.ge.s32.totalorder %s15, 4
      %s22 = sphi 0, %s34
      %s23 = sphi 0, %s30
      %s24 = sphi 0, %s22
      %s25 = sphi 0, %s23
      %s26 = sphi 0, %s24
      %s27 = sphi 0, %s25
      %s37 = sphi 0, %s39
      %s40 = sphi 0, %s37
      %s41 = sphi 0, %s40
      %s57 = sphi 0, %s41
      %s63 = sphi 0, %s65
      %s66 = sphi 0, %s63
      %s67 = sphi 0, %s66
      %s83 = sphi 0, %s67
      %s91 = sphi 0, %s93
      %s94 = sphi 0, %s91
      %s95 = sphi 0, %s94
      %s111 = sphi 0, %s95
    $region4: #{tpu_custom_call.1} parent=1 // loop_header_branch
      %18 = sbr.rel (%p16) target = $region8
    $region5: #{tpu_custom_call.1} parent=1 // loop_body
      %s20 = ssub.s32 %s15, 1
      %s21 = ssub.s32 %s15, 2
      %s28 = sadd.s32 1, %s23
      %p29 = scmp.ge.s32.totalorder %s28, 1
      %s30 = scalar_select %p29, 0, %s28
      %s31 = sadd.s32 1, %s22
      %s32 = scalar_select %p29, %s31, %s22
      %p33 = scmp.ge.s32.totalorder %s32, 2
      %s34 = scalar_select %p33, 0, %s32
      %s35 = ssub.s32 %s22, %s34
      %p36 = scmp.eq.s32.totalorder %s35, 0
      %s38 = sadd.s32 %s37, 1
      %s39 = scalar_select %p36, %s37, %s38
      %p42 = pneg %p36
      %p43 = scmp.eq.s32.totalorder %s15, 1
      %p44 = por %p42, %p43
      %p45 = scmp.ne.s32.totalorder %s37, %s40
      %p46 = scmp.eq.s32.totalorder %s15, 0
      %p47 = por %p45, %p46
      %p48 = scmp.ne.s32.totalorder %s37, %s40
      %p49 = scmp.eq.s32.totalorder %s20, 1
      %p50 = por %p48, %p49
      %p51 = scmp.ne.s32.totalorder %s40, %s41
      %p52 = scmp.eq.s32.totalorder %s20, 0
      %p53 = por %p51, %p52
      %p54 = scmp.ne.s32.totalorder %s40, %s41
      %p55 = scmp.eq.s32.totalorder %s21, 1
      %p56 = por %p54, %p55
      %p58 = scmp.ne.s32.totalorder %s41, %s57
      %p59 = scmp.eq.s32.totalorder %s21, 0
      %p60 = por %p58, %p59
      %s61 = ssub.s32 %s23, %s30
      %p62 = scmp.eq.s32.totalorder %s61, 0
      %s64 = sadd.s32 %s63, 1
      %s65 = scalar_select %p62, %s63, %s64
      %p68 = pneg %p62
      %p69 = scmp.eq.s32.totalorder %s15, 1
      %p70 = por %p68, %p69
      %p71 = scmp.ne.s32.totalorder %s63, %s66
      %p72 = scmp.eq.s32.totalorder %s15, 0
      %p73 = por %p71, %p72
      %p74 = scmp.ne.s32.totalorder %s63, %s66
      %p75 = scmp.eq.s32.totalorder %s20, 1
      %p76 = por %p74, %p75
      %p77 = scmp.ne.s32.totalorder %s66, %s67
      %p78 = scmp.eq.s32.totalorder %s20, 0
      %p79 = por %p77, %p78
      %p80 = scmp.ne.s32.totalorder %s66, %s67
      %p81 = scmp.eq.s32.totalorder %s21, 1
      %p82 = por %p80, %p81
      %p84 = scmp.ne.s32.totalorder %s67, %s83
      %p85 = scmp.eq.s32.totalorder %s21, 0
      %p86 = por %p84, %p85
      %s87 = ssub.s32 %s22, %s34
      %s88 = ssub.s32 %s23, %s30
      %s89 = sor.u32 %s87, %s88
      %p90 = scmp.eq.s32.totalorder %s89, 0
      %s92 = sadd.s32 %s91, 1
      %s93 = scalar_select %p90, %s91, %s92
      %p96 = pneg %p90
      %p97 = scmp.eq.s32.totalorder %s15, 1
      %p98 = por %p96, %p97
      %p99 = scmp.ne.s32.totalorder %s91, %s94
      %p100 = scmp.eq.s32.totalorder %s15, 0
      %p101 = por %p99, %p100
      %p102 = scmp.ne.s32.totalorder %s91, %s94
      %p103 = scmp.eq.s32.totalorder %s20, 1
      %p104 = por %p102, %p103
      %p105 = scmp.ne.s32.totalorder %s94, %s95
      %p106 = scmp.eq.s32.totalorder %s20, 0
      %p107 = por %p105, %p106
      %p108 = scmp.ne.s32.totalorder %s94, %s95
      %p109 = scmp.eq.s32.totalorder %s21, 1
      %p110 = por %p108, %p109
      %p112 = scmp.ne.s32.totalorder %s95, %s111
      %p113 = scmp.eq.s32.totalorder %s21, 0
      %p114 = por %p112, %p113
      %p115 = scmp.le.s32.totalorder 1, %s15
      %p116 = scmp.lt.s32.totalorder %s15, 3
      %p117 = pnand %p115, %p116
      %p118 = pneg %p117
      // Predicated region
      $region9: #{tpu_custom_call.1} parent=5 // pred_check
        _
      $region10: #{tpu_custom_call.1} parent=5 // pred_check_branch
        %120 = sbr.rel (%p117) target = $region12
      $region11: #{tpu_custom_call.1} parent=5 // pred_region
        %s121 = ssub.s32 %s15, 1
        // Predicated region
        $region13: #{tpu_custom_call.1} parent=11 // pred_check
          %p122 = pneg %p79
        $region14: #{tpu_custom_call.1} parent=11 // pred_check_branch
          %124 = sbr.rel (%p122) target = $region16
        $region15: #{tpu_custom_call.1} parent=11 // pred_region
          %s125 = smul.u32 4, %s25
          %s127 = ssub.s32 8192, 8192
          %128 = vsyncadd [#allocation6], %s127
          %s129 = smul.addr %s125, 128
          %s130 = scalar_lea.hbm %s1, %s129
          %s131 = sshll.u32 [#allocation5], 4
          %s132 = int_to_ptr.vmem [resolvable:$true] %s131
          %137 = dma.hbm_to_vmem [thread:$0]  %s130, 8192, %s132, [#allocation6], 512, 512, 32
        $region16: #{tpu_custom_call.1} parent=11 // pred_fallthru
          _
      $region12: #{tpu_custom_call.1} parent=5 // pred_fallthru
        _
      %p138 = scmp.lt.s32.totalorder %s15, 2
      // Predicated region
      $region17: #{tpu_custom_call.1} parent=5 // pred_check
        %p139 = pneg %p138
      $region18: #{tpu_custom_call.1} parent=5 // pred_check_branch
        %141 = sbr.rel (%p139) target = $region20
      $region19: #{tpu_custom_call.1} parent=5 // pred_region
        // Predicated region
        $region21: #{tpu_custom_call.1} parent=19 // pred_check
          %p142 = pneg %p47
        $region22: #{tpu_custom_call.1} parent=19 // pred_check_branch
          %144 = sbr.rel (%p142) target = $region24
        $region23: #{tpu_custom_call.1} parent=19 // pred_region
          %s145 = sand.u32 %s37, 1
          %s146 = scalar_lea.sflag [#allocation3], %s145
          %s147 = sand.u32 %s37, 1
          %s148 = smul.addr %s147, 152
          %s149 = scalar_lea.vmem [#allocation2], %s148
          %s150 = smul.u32 19, %s22
          %s152 = ssub.s32 2432, 2432
          %153 = vsyncadd %s146, %s152
          %s154 = smul.addr %s150, 128
          %s155 = scalar_lea.hbm %s0, %s154
          %s156 = sshll.u32 %s149, 4
          %s157 = int_to_ptr.vmem [resolvable:$true] %s156
          %162 = dma.hbm_to_vmem [thread:$0]  %s155, 2432, %s157, %s146, 128, 128, 8
        $region24: #{tpu_custom_call.1} parent=19 // pred_fallthru
          _
      $region20: #{tpu_custom_call.1} parent=5 // pred_fallthru
        _
      %p163 = scmp.le.s32.totalorder 1, %s15
      %p164 = scmp.lt.s32.totalorder %s15, 3
      %p165 = pnand %p163, %p164
      %p166 = pneg %p165
      // Predicated region
      $region25: #{tpu_custom_call.1} parent=5 // pred_check
        _
      $region26: #{tpu_custom_call.1} parent=5 // pred_check_branch
        %168 = sbr.rel (%p165) target = $region28
      $region27: #{tpu_custom_call.1} parent=5 // pred_region
        %s169 = ssub.s32 %s15, 1
        %s170 = sand.u32 %s40, 1
        %s171 = scalar_lea.sflag [#allocation3], %s170
        %s172 = sand.u32 %s40, 1
        %s173 = smul.addr %s172, 152
        %s174 = scalar_lea.vmem [#allocation2], %s173
        // Predicated region
        $region29: #{tpu_custom_call.1} parent=27 // pred_check
          %p175 = pneg %p53
        $region30: #{tpu_custom_call.1} parent=27 // pred_check_branch
          %177 = sbr.rel (%p175) target = $region32
        $region31: #{tpu_custom_call.1} parent=27 // pred_region
          %178 = dma.done %s171, 2432
        $region32: #{tpu_custom_call.1} parent=27 // pred_fallthru
          _
        // Predicated region
        $region33: #{tpu_custom_call.1} parent=27 // pred_check
          %p179 = pneg %p79
        $region34: #{tpu_custom_call.1} parent=27 // pred_check_branch
          %181 = sbr.rel (%p179) target = $region36
        $region35: #{tpu_custom_call.1} parent=27 // pred_region
          %182 = dma.done [#allocation6], 8192
        $region36: #{tpu_custom_call.1} parent=27 // pred_fallthru
          _
        %s183 = sand.u32 %s40, 1
        %s184 = scalar_lea.sflag [#allocation3], %s183
        %s185 = sand.u32 %s40, 1
        %s186 = smul.addr %s185, 152
        %s187 = scalar_lea.vmem [#allocation2], %s186
        %p188 = pneg %p53
        %p189 = pneg %p50
        %p190 = pneg %p79
        %p191 = pneg %p76
        %p192 = pneg %p107
        %p193 = pneg %p104
        %s194 = sand.u32 %s94, 1
        %s195 = scalar_lea.sflag [#allocation4], %s194
        %s196 = sand.u32 %s94, 1
        %s197 = smul.addr %s196, 608
        %s198 = scalar_lea.vmem [#allocation7], %s197
        %s199 = smul.u32 19, %s24
        %s200 = smul.u32 4, %s25
        %s201 = smul.u32 19, %s24
        %s202 = smul.u32 4, %s25
        %v203 = vld [vmem:[%s174] sm:$0xff]
        %v204 = vld [vmem:[%s174 + $0x8] sm:$0xff]
        %v205 = vld [vmem:[%s174 + $0x10] sm:$0xff]
        %v206 = vld [vmem:[%s174 + $0x18] sm:$0xff]
        %v207 = vld [vmem:[%s174 + $0x20] sm:$0xff]
        %v208 = vld [vmem:[%s174 + $0x28] sm:$0xff]
        %v209 = vld [vmem:[%s174 + $0x30] sm:$0xff]
        %v210 = vld [vmem:[%s174 + $0x38] sm:$0xff]
        %v211 = vld [vmem:[%s174 + $0x40] sm:$0xff]
        %v212 = vld [vmem:[%s174 + $0x48] sm:$0xff]
        %v213 = vld [vmem:[%s174 + $0x50] sm:$0xff]
        %v214 = vld [vmem:[%s174 + $0x58] sm:$0xff]
        %v215 = vld [vmem:[%s174 + $0x60] sm:$0xff]
        %v216 = vld [vmem:[%s174 + $0x68] sm:$0xff]
        %v217 = vld [vmem:[%s174 + $0x70] sm:$0xff]
        %v218 = vld [vmem:[%s174 + $0x78] sm:$0xff]
        %v219 = vld [vmem:[%s174 + $0x80] sm:$0xff]
        %v220 = vld [vmem:[%s174 + $0x88] sm:$0xff]
        %v221 = vld [vmem:[%s174 + $0x90] sm:$0xff]
        %v222 = vld [vmem:[#allocation5] sm:$0xff]
        %v223 = vld [vmem:[#allocation5 + $0x8] sm:$0xff]
        %v224 = vld [vmem:[#allocation5 + $0x10] sm:$0xff]
        %v225 = vld [vmem:[#allocation5 + $0x18] sm:$0xff]
        %v226 = vld [vmem:[#allocation5 + $0x20] sm:$0xff]
        %v227 = vld [vmem:[#allocation5 + $0x28] sm:$0xff]
        %v228 = vld [vmem:[#allocation5 + $0x30] sm:$0xff]
        %v229 = vld [vmem:[#allocation5 + $0x38] sm:$0xff]
        %v230 = vld [vmem:[#allocation5 + $0x40] sm:$0xff]
        %v231 = vld [vmem:[#allocation5 + $0x48] sm:$0xff]
        %v232 = vld [vmem:[#allocation5 + $0x50] sm:$0xff]
        %v233 = vld [vmem:[#allocation5 + $0x58] sm:$0xff]
        %v234 = vld [vmem:[#allocation5 + $0x60] sm:$0xff]
        %v235 = vld [vmem:[#allocation5 + $0x68] sm:$0xff]
        %v236 = vld [vmem:[#allocation5 + $0x70] sm:$0xff]
        %v237 = vld [vmem:[#allocation5 + $0x78] sm:$0xff]
        %v238 = vld [vmem:[#allocation5 + $0x80] sm:$0xff]
        %v239 = vld [vmem:[#allocation5 + $0x88] sm:$0xff]
        %v240 = vld [vmem:[#allocation5 + $0x90] sm:$0xff]
        %v241 = vld [vmem:[#allocation5 + $0x98] sm:$0xff]
        %v242 = vld [vmem:[#allocation5 + $0xa0] sm:$0xff]
        %v243 = vld [vmem:[#allocation5 + $0xa8] sm:$0xff]
        %v244 = vld [vmem:[#allocation5 + $0xb0] sm:$0xff]
        %v245 = vld [vmem:[#allocation5 + $0xb8] sm:$0xff]
        %v246 = vld [vmem:[#allocation5 + $0xc0] sm:$0xff]
        %v247 = vld [vmem:[#allocation5 + $0xc8] sm:$0xff]
        %v248 = vld [vmem:[#allocation5 + $0xd0] sm:$0xff]
        %v249 = vld [vmem:[#allocation5 + $0xd8] sm:$0xff]
        %v250 = vld [vmem:[#allocation5 + $0xe0] sm:$0xff]
        %v251 = vld [vmem:[#allocation5 + $0xe8] sm:$0xff]
        %v252 = vld [vmem:[#allocation5 + $0xf0] sm:$0xff]
        %v253 = vld [vmem:[#allocation5 + $0xf8] sm:$0xff]
        %v254 = vld [vmem:[#allocation5 + $0x100] sm:$0xff]
        %v255 = vld [vmem:[#allocation5 + $0x108] sm:$0xff]
        %v256 = vld [vmem:[#allocation5 + $0x110] sm:$0xff]
        %v257 = vld [vmem:[#allocation5 + $0x118] sm:$0xff]
        %v258 = vld [vmem:[#allocation5 + $0x120] sm:$0xff]
        %v259 = vld [vmem:[#allocation5 + $0x128] sm:$0xff]
        %v260 = vld [vmem:[#allocation5 + $0x130] sm:$0xff]
        %v261 = vld [vmem:[#allocation5 + $0x138] sm:$0xff]
        %v262 = vld [vmem:[#allocation5 + $0x140] sm:$0xff]
        %v263 = vld [vmem:[#allocation5 + $0x148] sm:$0xff]
        %v264 = vld [vmem:[#allocation5 + $0x150] sm:$0xff]
        %v265 = vld [vmem:[#allocation5 + $0x158] sm:$0xff]
        %v266 = vld [vmem:[#allocation5 + $0x160] sm:$0xff]
        %v267 = vld [vmem:[#allocation5 + $0x168] sm:$0xff]
        %v268 = vld [vmem:[#allocation5 + $0x170] sm:$0xff]
        %v269 = vld [vmem:[#allocation5 + $0x178] sm:$0xff]
        %v270 = vld [vmem:[#allocation5 + $0x180] sm:$0xff]
        %v271 = vld [vmem:[#allocation5 + $0x188] sm:$0xff]
        %v272 = vld [vmem:[#allocation5 + $0x190] sm:$0xff]
        %v273 = vld [vmem:[#allocation5 + $0x198] sm:$0xff]
        %v274 = vld [vmem:[#allocation5 + $0x1a0] sm:$0xff]
        %v275 = vld [vmem:[#allocation5 + $0x1a8] sm:$0xff]
        %v276 = vld [vmem:[#allocation5 + $0x1b0] sm:$0xff]
        %v277 = vld [vmem:[#allocation5 + $0x1b8] sm:$0xff]
        %v278 = vld [vmem:[#allocation5 + $0x1c0] sm:$0xff]
        %v279 = vld [vmem:[#allocation5 + $0x1c8] sm:$0xff]
        %v280 = vld [vmem:[#allocation5 + $0x1d0] sm:$0xff]
        %v281 = vld [vmem:[#allocation5 + $0x1d8] sm:$0xff]
        %v282 = vld [vmem:[#allocation5 + $0x1e0] sm:$0xff]
        %v283 = vld [vmem:[#allocation5 + $0x1e8] sm:$0xff]
        %v284 = vld [vmem:[#allocation5 + $0x1f0] sm:$0xff]
        %v285 = vld [vmem:[#allocation5 + $0x1f8] sm:$0xff]
        %286 = vmatprep.subr.mxu0 %v283
        %287 = vmatpush1.msra.mxu0 %v282
        %288 = vmatprep.subr.mxu0 %v279
        %289 = vmatpush1.msra.mxu0 %v278
        %290 = vmatprep.subr.mxu0 %v275
        %291 = vmatpush1.msra.mxu0 %v274
        %292 = vmatprep.subr.mxu0 %v271
        %293 = vmatpush1.msra.mxu0 %v270
        %294 = vmatprep.subr.mxu0 %v267
        %295 = vmatpush1.msra.mxu0 %v266
        %296 = vmatprep.subr.mxu0 %v263
        %297 = vmatpush1.msra.mxu0 %v262
        %298 = vmatprep.subr.mxu0 %v259
        %299 = vmatpush1.msra.mxu0 %v258
        %300 = vmatprep.subr.mxu0 %v255
        %301 = vmatpush1.msra.mxu0 %v254
        %302 = vmatprep.subr.mxu0 %v251
        %303 = vmatpush1.msra.mxu0 %v250
        %304 = vmatprep.subr.mxu0 %v247
        %305 = vmatpush1.msra.mxu0 %v246
        %306 = vmatprep.subr.mxu0 %v243
        %307 = vmatpush1.msra.mxu0 %v242
        %308 = vmatprep.subr.mxu0 %v239
        %309 = vmatpush1.msra.mxu0 %v238
        %310 = vmatprep.subr.mxu0 %v235
        %311 = vmatpush1.msra.mxu0 %v234
        %312 = vmatprep.subr.mxu0 %v231
        %313 = vmatpush1.msra.mxu0 %v230
        %314 = vmatprep.subr.mxu0 %v227
        %315 = vmatpush1.msra.mxu0 %v226
        %316 = vmatprep.subr.mxu0 %v223
        %317 = vmatpush1.msra.mxu0 %v222
        %318 = vmatprep.subr.mxu0 0.0
        %319 = vmatpush2.msra.mxu0 0.0
        %320 = vmatprep.subr.mxu0 0.0
        %321 = vmatpush2.msra.mxu0 0.0
        %322 = vmatprep.subr.mxu0 0.0
        %323 = vmatpush2.msra.mxu0 0.0
        %324 = vmatprep.subr.mxu0 0.0
        %325 = vmatpush2.msra.mxu0 0.0
        %326 = vmatprep.subr.mxu0 0.0
        %327 = vmatpush2.msra.mxu0 0.0
        %328 = vmatprep.subr.mxu0 0.0
        %329 = vmatpush2.msra.mxu0 0.0
        %330 = vmatprep.subr.mxu0 0.0
        %331 = vmatpush2.msra.mxu0 0.0
        %332 = vmatprep.subr.mxu0 0.0
        %333 = vmatpush2.msra.mxu0 0.0
        %334 = vmatprep.subr.mxu0 0.0
        %335 = vmatpush2.msra.mxu0 0.0
        %336 = vmatprep.subr.mxu0 0.0
        %337 = vmatpush2.msra.mxu0 0.0
        %338 = vmatprep.subr.mxu0 0.0
        %339 = vmatpush2.msra.mxu0 0.0
        %340 = vmatprep.subr.mxu0 0.0
        %341 = vmatpush2.msra.mxu0 0.0
        %342 = vmatprep.subr.mxu0 0.0
        %343 = vmatpush2.msra.mxu0 0.0
        %344 = vmatprep.subr.mxu0 0.0
        %345 = vmatpush2.msra.mxu0 0.0
        %346 = vmatprep.subr.mxu0 0.0
        %347 = vmatpush2.msra.mxu0 0.0
        %348 = vmatprep.subr.mxu0 0.0
        %349 = vmatpush2.msra.mxu0 0.0
        %350 = vmatprep.mubr.f32.mxu0 0.0
        %351 = vmatmul.mubr.f32.gmra.mxu0 %v203
        %v352 = vpop.f32.mrf.mxu0
        %v353 = vadd.f32 0.0, %v352
        %v354 = vpop.f32.mrf.mxu0
        %v355 = vadd.f32 0.0, %v354
        %356 = vmatprep.mubr.f32.mxu0 0.0
        %357 = vmatmul.mubr.f32.gmra.mxu0 %v204
        %v358 = vpop.f32.mrf.mxu0
        %v359 = vadd.f32 0.0, %v358
        %v360 = vpop.f32.mrf.mxu0
        %v361 = vadd.f32 0.0, %v360
        %362 = vmatprep.mubr.f32.mxu0 0.0
        %363 = vmatmul.mubr.f32.gmra.mxu0 %v205
        %v364 = vpop.f32.mrf.mxu0
        %v365 = vadd.f32 0.0, %v364
        %v366 = vpop.f32.mrf.mxu0
        %v367 = vadd.f32 0.0, %v366
        %368 = vmatprep.mubr.f32.mxu0 0.0
        %369 = vmatmul.mubr.f32.gmra.mxu0 %v206
        %v370 = vpop.f32.mrf.mxu0
        %v371 = vadd.f32 0.0, %v370
        %v372 = vpop.f32.mrf.mxu0
        %v373 = vadd.f32 0.0, %v372
        %374 = vmatprep.mubr.f32.mxu0 0.0
        %375 = vmatmul.mubr.f32.gmra.mxu0 %v207
        %v376 = vpop.f32.mrf.mxu0
        %v377 = vadd.f32 0.0, %v376
        %v378 = vpop.f32.mrf.mxu0
        %v379 = vadd.f32 0.0, %v378
        %380 = vmatprep.mubr.f32.mxu0 0.0
        %381 = vmatmul.mubr.f32.gmra.mxu0 %v208
        %v382 = vpop.f32.mrf.mxu0
        %v383 = vadd.f32 0.0, %v382
        %v384 = vpop.f32.mrf.mxu0
        %v385 = vadd.f32 0.0, %v384
        %386 = vmatprep.mubr.f32.mxu0 0.0
        %387 = vmatmul.mubr.f32.gmra.mxu0 %v209
        %v388 = vpop.f32.mrf.mxu0
        %v389 = vadd.f32 0.0, %v388
        %v390 = vpop.f32.mrf.mxu0
        %v391 = vadd.f32 0.0, %v390
        %392 = vmatprep.mubr.f32.mxu0 0.0
        %393 = vmatmul.mubr.f32.gmra.mxu0 %v210
        %v394 = vpop.f32.mrf.mxu0
        %v395 = vadd.f32 0.0, %v394
        %v396 = vpop.f32.mrf.mxu0
        %v397 = vadd.f32 0.0, %v396
        %398 = vmatprep.mubr.f32.mxu0 0.0
        %399 = vmatmul.mubr.f32.gmra.mxu0 %v211
        %v400 = vpop.f32.mrf.mxu0
        %v401 = vadd.f32 0.0, %v400
        %v402 = vpop.f32.mrf.mxu0
        %v403 = vadd.f32 0.0, %v402
        %404 = vmatprep.mubr.f32.mxu0 0.0
        %405 = vmatmul.mubr.f32.gmra.mxu0 %v212
        %v406 = vpop.f32.mrf.mxu0
        %v407 = vadd.f32 0.0, %v406
        %v408 = vpop.f32.mrf.mxu0
        %v409 = vadd.f32 0.0, %v408
        %410 = vmatprep.mubr.f32.mxu0 0.0
        %411 = vmatmul.mubr.f32.gmra.mxu0 %v213
        %v412 = vpop.f32.mrf.mxu0
        %v413 = vadd.f32 0.0, %v412
        %v414 = vpop.f32.mrf.mxu0
        %v415 = vadd.f32 0.0, %v414
        %416 = vmatprep.mubr.f32.mxu0 0.0
        %417 = vmatmul.mubr.f32.gmra.mxu0 %v214
        %v418 = vpop.f32.mrf.mxu0
        %v419 = vadd.f32 0.0, %v418
        %v420 = vpop.f32.mrf.mxu0
        %v421 = vadd.f32 0.0, %v420
        %422 = vmatprep.mubr.f32.mxu0 0.0
        %423 = vmatmul.mubr.f32.gmra.mxu0 %v215
        %v424 = vpop.f32.mrf.mxu0
        %v425 = vadd.f32 0.0, %v424
        %v426 = vpop.f32.mrf.mxu0
        %v427 = vadd.f32 0.0, %v426
        %428 = vmatprep.mubr.f32.mxu0 0.0
        %429 = vmatmul.mubr.f32.gmra.mxu0 %v216
        %v430 = vpop.f32.mrf.mxu0
        %v431 = vadd.f32 0.0, %v430
        %v432 = vpop.f32.mrf.mxu0
        %v433 = vadd.f32 0.0, %v432
        %434 = vmatprep.mubr.f32.mxu0 0.0
        %435 = vmatmul.mubr.f32.gmra.mxu0 %v217
        %v436 = vpop.f32.mrf.mxu0
        %v437 = vadd.f32 0.0, %v436
        %v438 = vpop.f32.mrf.mxu0
        %v439 = vadd.f32 0.0, %v438
        %440 = vmatprep.mubr.f32.mxu0 0.0
        %441 = vmatmul.mubr.f32.gmra.mxu0 %v218
        %v442 = vpop.f32.mrf.mxu0
        %v443 = vadd.f32 0.0, %v442
        %v444 = vpop.f32.mrf.mxu0
        %v445 = vadd.f32 0.0, %v444
        %446 = vmatprep.mubr.f32.mxu0 0.0
        %447 = vmatmul.mubr.f32.gmra.mxu0 %v219
        %v448 = vpop.f32.mrf.mxu0
        %v449 = vadd.f32 0.0, %v448
        %v450 = vpop.f32.mrf.mxu0
        %v451 = vadd.f32 0.0, %v450
        %452 = vmatprep.mubr.f32.mxu0 0.0
        %453 = vmatmul.mubr.f32.gmra.mxu0 %v220
        %v454 = vpop.f32.mrf.mxu0
        %v455 = vadd.f32 0.0, %v454
        %v456 = vpop.f32.mrf.mxu0
        %v457 = vadd.f32 0.0, %v456
        %458 = vmatprep.mubr.f32.mxu0 0.0
        %459 = vmatmul.mubr.f32.gmra.mxu0 %v221
        %v460 = vpop.f32.mrf.mxu0
        %v461 = vadd.f32 0.0, %v460
        %v462 = vpop.f32.mrf.mxu0
        %v463 = vadd.f32 0.0, %v462
        %464 = vdwg.mxu0
        %465 = vmatprep.subr.mxu0 %v285
        %466 = vmatpush1.msra.mxu0 %v284
        %467 = vmatprep.subr.mxu0 %v281
        %468 = vmatpush1.msra.mxu0 %v280
        %469 = vmatprep.subr.mxu0 %v277
        %470 = vmatpush1.msra.mxu0 %v276
        %471 = vmatprep.subr.mxu0 %v273
        %472 = vmatpush1.msra.mxu0 %v272
        %473 = vmatprep.subr.mxu0 %v269
        %474 = vmatpush1.msra.mxu0 %v268
        %475 = vmatprep.subr.mxu0 %v265
        %476 = vmatpush1.msra.mxu0 %v264
        %477 = vmatprep.subr.mxu0 %v261
        %478 = vmatpush1.msra.mxu0 %v260
        %479 = vmatprep.subr.mxu0 %v257
        %480 = vmatpush1.msra.mxu0 %v256
        %481 = vmatprep.subr.mxu0 %v253
        %482 = vmatpush1.msra.mxu0 %v252
        %483 = vmatprep.subr.mxu0 %v249
        %484 = vmatpush1.msra.mxu0 %v248
        %485 = vmatprep.subr.mxu0 %v245
        %486 = vmatpush1.msra.mxu0 %v244
        %487 = vmatprep.subr.mxu0 %v241
        %488 = vmatpush1.msra.mxu0 %v240
        %489 = vmatprep.subr.mxu0 %v237
        %490 = vmatpush1.msra.mxu0 %v236
        %491 = vmatprep.subr.mxu0 %v233
        %492 = vmatpush1.msra.mxu0 %v232
        %493 = vmatprep.subr.mxu0 %v229
        %494 = vmatpush1.msra.mxu0 %v228
        %495 = vmatprep.subr.mxu0 %v225
        %496 = vmatpush1.msra.mxu0 %v224
        %497 = vmatprep.subr.mxu0 0.0
        %498 = vmatpush2.msra.mxu0 0.0
        %499 = vmatprep.subr.mxu0 0.0
        %500 = vmatpush2.msra.mxu0 0.0
        %501 = vmatprep.subr.mxu0 0.0
        %502 = vmatpush2.msra.mxu0 0.0
        %503 = vmatprep.subr.mxu0 0.0
        %504 = vmatpush2.msra.mxu0 0.0
        %505 = vmatprep.subr.mxu0 0.0
        %506 = vmatpush2.msra.mxu0 0.0
        %507 = vmatprep.subr.mxu0 0.0
        %508 = vmatpush2.msra.mxu0 0.0
        %509 = vmatprep.subr.mxu0 0.0
        %510 = vmatpush2.msra.mxu0 0.0
        %511 = vmatprep.subr.mxu0 0.0
        %512 = vmatpush2.msra.mxu0 0.0
        %513 = vmatprep.subr.mxu0 0.0
        %514 = vmatpush2.msra.mxu0 0.0
        %515 = vmatprep.subr.mxu0 0.0
        %516 = vmatpush2.msra.mxu0 0.0
        %517 = vmatprep.subr.mxu0 0.0
        %518 = vmatpush2.msra.mxu0 0.0
        %519 = vmatprep.subr.mxu0 0.0
        %520 = vmatpush2.msra.mxu0 0.0
        %521 = vmatprep.subr.mxu0 0.0
        %522 = vmatpush2.msra.mxu0 0.0
        %523 = vmatprep.subr.mxu0 0.0
        %524 = vmatpush2.msra.mxu0 0.0
        %525 = vmatprep.subr.mxu0 0.0
        %526 = vmatpush2.msra.mxu0 0.0
        %527 = vmatprep.subr.mxu0 0.0
        %528 = vmatpush2.msra.mxu0 0.0
        %529 = vmatprep.mubr.f32.mxu0 0.0
        %530 = vmatmul.mubr.f32.gmra.mxu0 %v203
        %v531 = vpop.f32.mrf.mxu0
        %v532 = vadd.f32 0.0, %v531
        %v533 = vpop.f32.mrf.mxu0
        %v534 = vadd.f32 0.0, %v533
        %535 = vmatprep.mubr.f32.mxu0 0.0
        %536 = vmatmul.mubr.f32.gmra.mxu0 %v204
        %v537 = vpop.f32.mrf.mxu0
        %v538 = vadd.f32 0.0, %v537
        %v539 = vpop.f32.mrf.mxu0
        %v540 = vadd.f32 0.0, %v539
        %541 = vmatprep.mubr.f32.mxu0 0.0
        %542 = vmatmul.mubr.f32.gmra.mxu0 %v205
        %v543 = vpop.f32.mrf.mxu0
        %v544 = vadd.f32 0.0, %v543
        %v545 = vpop.f32.mrf.mxu0
        %v546 = vadd.f32 0.0, %v545
        %547 = vmatprep.mubr.f32.mxu0 0.0
        %548 = vmatmul.mubr.f32.gmra.mxu0 %v206
        %v549 = vpop.f32.mrf.mxu0
        %v550 = vadd.f32 0.0, %v549
        %v551 = vpop.f32.mrf.mxu0
        %v552 = vadd.f32 0.0, %v551
        %553 = vmatprep.mubr.f32.mxu0 0.0
        %554 = vmatmul.mubr.f32.gmra.mxu0 %v207
        %v555 = vpop.f32.mrf.mxu0
        %v556 = vadd.f32 0.0, %v555
        %v557 = vpop.f32.mrf.mxu0
        %v558 = vadd.f32 0.0, %v557
        %559 = vmatprep.mubr.f32.mxu0 0.0
        %560 = vmatmul.mubr.f32.gmra.mxu0 %v208
        %v561 = vpop.f32.mrf.mxu0
        %v562 = vadd.f32 0.0, %v561
        %v563 = vpop.f32.mrf.mxu0
        %v564 = vadd.f32 0.0, %v563
        %565 = vmatprep.mubr.f32.mxu0 0.0
        %566 = vmatmul.mubr.f32.gmra.mxu0 %v209
        %v567 = vpop.f32.mrf.mxu0
        %v568 = vadd.f32 0.0, %v567
        %v569 = vpop.f32.mrf.mxu0
        %v570 = vadd.f32 0.0, %v569
        %571 = vmatprep.mubr.f32.mxu0 0.0
        %572 = vmatmul.mubr.f32.gmra.mxu0 %v210
        %v573 = vpop.f32.mrf.mxu0
        %v574 = vadd.f32 0.0, %v573
        %v575 = vpop.f32.mrf.mxu0
        %v576 = vadd.f32 0.0, %v575
        %577 = vmatprep.mubr.f32.mxu0 0.0
        %578 = vmatmul.mubr.f32.gmra.mxu0 %v211
        %v579 = vpop.f32.mrf.mxu0
        %v580 = vadd.f32 0.0, %v579
        %v581 = vpop.f32.mrf.mxu0
        %v582 = vadd.f32 0.0, %v581
        %583 = vmatprep.mubr.f32.mxu0 0.0
        %584 = vmatmul.mubr.f32.gmra.mxu0 %v212
        %v585 = vpop.f32.mrf.mxu0
        %v586 = vadd.f32 0.0, %v585
        %v587 = vpop.f32.mrf.mxu0
        %v588 = vadd.f32 0.0, %v587
        %589 = vmatprep.mubr.f32.mxu0 0.0
        %590 = vmatmul.mubr.f32.gmra.mxu0 %v213
        %v591 = vpop.f32.mrf.mxu0
        %v592 = vadd.f32 0.0, %v591
        %v593 = vpop.f32.mrf.mxu0
        %v594 = vadd.f32 0.0, %v593
        %595 = vmatprep.mubr.f32.mxu0 0.0
        %596 = vmatmul.mubr.f32.gmra.mxu0 %v214
        %v597 = vpop.f32.mrf.mxu0
        %v598 = vadd.f32 0.0, %v597
        %v599 = vpop.f32.mrf.mxu0
        %v600 = vadd.f32 0.0, %v599
        %601 = vmatprep.mubr.f32.mxu0 0.0
        %602 = vmatmul.mubr.f32.gmra.mxu0 %v215
        %v603 = vpop.f32.mrf.mxu0
        %v604 = vadd.f32 0.0, %v603
        %v605 = vpop.f32.mrf.mxu0
        %v606 = vadd.f32 0.0, %v605
        %607 = vmatprep.mubr.f32.mxu0 0.0
        %608 = vmatmul.mubr.f32.gmra.mxu0 %v216
        %v609 = vpop.f32.mrf.mxu0
        %v610 = vadd.f32 0.0, %v609
        %v611 = vpop.f32.mrf.mxu0
        %v612 = vadd.f32 0.0, %v611
        %613 = vmatprep.mubr.f32.mxu0 0.0
        %614 = vmatmul.mubr.f32.gmra.mxu0 %v217
        %v615 = vpop.f32.mrf.mxu0
        %v616 = vadd.f32 0.0, %v615
        %v617 = vpop.f32.mrf.mxu0
        %v618 = vadd.f32 0.0, %v617
        %619 = vmatprep.mubr.f32.mxu0 0.0
        %620 = vmatmul.mubr.f32.gmra.mxu0 %v218
        %v621 = vpop.f32.mrf.mxu0
        %v622 = vadd.f32 0.0, %v621
        %v623 = vpop.f32.mrf.mxu0
        %v624 = vadd.f32 0.0, %v623
        %625 = vmatprep.mubr.f32.mxu0 0.0
        %626 = vmatmul.mubr.f32.gmra.mxu0 %v219
        %v627 = vpop.f32.mrf.mxu0
        %v628 = vadd.f32 0.0, %v627
        %v629 = vpop.f32.mrf.mxu0
        %v630 = vadd.f32 0.0, %v629
        %631 = vmatprep.mubr.f32.mxu0 0.0
        %632 = vmatmul.mubr.f32.gmra.mxu0 %v220
        %v633 = vpop.f32.mrf.mxu0
        %v634 = vadd.f32 0.0, %v633
        %v635 = vpop.f32.mrf.mxu0
        %v636 = vadd.f32 0.0, %v635
        %637 = vmatprep.mubr.f32.mxu0 0.0
        %638 = vmatmul.mubr.f32.gmra.mxu0 %v221
        %v639 = vpop.f32.mrf.mxu0
        %v640 = vadd.f32 0.0, %v639
        %v641 = vpop.f32.mrf.mxu0
        %v642 = vadd.f32 0.0, %v641
        %643 = vdwg.mxu0
        %644 = vst [vmem:[%s198] sm:$0xff] %v353
        %645 = vst [vmem:[%s198 + $0x8] sm:$0xff] %v355
        %646 = vst [vmem:[%s198 + $0x10] sm:$0xff] %v532
        %647 = vst [vmem:[%s198 + $0x18] sm:$0xff] %v534
        %648 = vst [vmem:[%s198 + $0x20] sm:$0xff] %v359
        %649 = vst [vmem:[%s198 + $0x28] sm:$0xff] %v361
        %650 = vst [vmem:[%s198 + $0x30] sm:$0xff] %v538
        %651 = vst [vmem:[%s198 + $0x38] sm:$0xff] %v540
        %652 = vst [vmem:[%s198 + $0x40] sm:$0xff] %v365
        %653 = vst [vmem:[%s198 + $0x48] sm:$0xff] %v367
        %654 = vst [vmem:[%s198 + $0x50] sm:$0xff] %v544
        %655 = vst [vmem:[%s198 + $0x58] sm:$0xff] %v546
        %656 = vst [vmem:[%s198 + $0x60] sm:$0xff] %v371
        %657 = vst [vmem:[%s198 + $0x68] sm:$0xff] %v373
        %658 = vst [vmem:[%s198 + $0x70] sm:$0xff] %v550
        %659 = vst [vmem:[%s198 + $0x78] sm:$0xff] %v552
        %660 = vst [vmem:[%s198 + $0x80] sm:$0xff] %v377
        %661 = vst [vmem:[%s198 + $0x88] sm:$0xff] %v379
        %662 = vst [vmem:[%s198 + $0x90] sm:$0xff] %v556
        %663 = vst [vmem:[%s198 + $0x98] sm:$0xff] %v558
        %664 = vst [vmem:[%s198 + $0xa0] sm:$0xff] %v383
        %665 = vst [vmem:[%s198 + $0xa8] sm:$0xff] %v385
        %666 = vst [vmem:[%s198 + $0xb0] sm:$0xff] %v562
        %667 = vst [vmem:[%s198 + $0xb8] sm:$0xff] %v564
        %668 = vst [vmem:[%s198 + $0xc0] sm:$0xff] %v389
        %669 = vst [vmem:[%s198 + $0xc8] sm:$0xff] %v391
        %670 = vst [vmem:[%s198 + $0xd0] sm:$0xff] %v568
        %671 = vst [vmem:[%s198 + $0xd8] sm:$0xff] %v570
        %672 = vst [vmem:[%s198 + $0xe0] sm:$0xff] %v395
        %673 = vst [vmem:[%s198 + $0xe8] sm:$0xff] %v397
        %674 = vst [vmem:[%s198 + $0xf0] sm:$0xff] %v574
        %675 = vst [vmem:[%s198 + $0xf8] sm:$0xff] %v576
        %676 = vst [vmem:[%s198 + $0x100] sm:$0xff] %v401
        %677 = vst [vmem:[%s198 + $0x108] sm:$0xff] %v403
        %678 = vst [vmem:[%s198 + $0x110] sm:$0xff] %v580
        %679 = vst [vmem:[%s198 + $0x118] sm:$0xff] %v582
        %680 = vst [vmem:[%s198 + $0x120] sm:$0xff] %v407
        %681 = vst [vmem:[%s198 + $0x128] sm:$0xff] %v409
        %682 = vst [vmem:[%s198 + $0x130] sm:$0xff] %v586
        %683 = vst [vmem:[%s198 + $0x138] sm:$0xff] %v588
        %684 = vst [vmem:[%s198 + $0x140] sm:$0xff] %v413
        %685 = vst [vmem:[%s198 + $0x148] sm:$0xff] %v415
        %686 = vst [vmem:[%s198 + $0x150] sm:$0xff] %v592
        %687 = vst [vmem:[%s198 + $0x158] sm:$0xff] %v594
        %688 = vst [vmem:[%s198 + $0x160] sm:$0xff] %v419
        %689 = vst [vmem:[%s198 + $0x168] sm:$0xff] %v421
        %690 = vst [vmem:[%s198 + $0x170] sm:$0xff] %v598
        %691 = vst [vmem:[%s198 + $0x178] sm:$0xff] %v600
        %692 = vst [vmem:[%s198 + $0x180] sm:$0xff] %v425
        %693 = vst [vmem:[%s198 + $0x188] sm:$0xff] %v427
        %694 = vst [vmem:[%s198 + $0x190] sm:$0xff] %v604
        %695 = vst [vmem:[%s198 + $0x198] sm:$0xff] %v606
        %696 = vst [vmem:[%s198 + $0x1a0] sm:$0xff] %v431
        %697 = vst [vmem:[%s198 + $0x1a8] sm:$0xff] %v433
        %698 = vst [vmem:[%s198 + $0x1b0] sm:$0xff] %v610
        %699 = vst [vmem:[%s198 + $0x1b8] sm:$0xff] %v612
        %700 = vst [vmem:[%s198 + $0x1c0] sm:$0xff] %v437
        %701 = vst [vmem:[%s198 + $0x1c8] sm:$0xff] %v439
        %702 = vst [vmem:[%s198 + $0x1d0] sm:$0xff] %v616
        %703 = vst [vmem:[%s198 + $0x1d8] sm:$0xff] %v618
        %704 = vst [vmem:[%s198 + $0x1e0] sm:$0xff] %v443
        %705 = vst [vmem:[%s198 + $0x1e8] sm:$0xff] %v445
        %706 = vst [vmem:[%s198 + $0x1f0] sm:$0xff] %v622
        %707 = vst [vmem:[%s198 + $0x1f8] sm:$0xff] %v624
        %708 = vst [vmem:[%s198 + $0x200] sm:$0xff] %v449
        %709 = vst [vmem:[%s198 + $0x208] sm:$0xff] %v451
        %710 = vst [vmem:[%s198 + $0x210] sm:$0xff] %v628
        %711 = vst [vmem:[%s198 + $0x218] sm:$0xff] %v630
        %712 = vst [vmem:[%s198 + $0x220] sm:$0xff] %v455
        %713 = vst [vmem:[%s198 + $0x228] sm:$0xff] %v457
        %714 = vst [vmem:[%s198 + $0x230] sm:$0xff] %v634
        %715 = vst [vmem:[%s198 + $0x238] sm:$0xff] %v636
        %716 = vst [vmem:[%s198 + $0x240] sm:$0xff] %v461
        %717 = vst [vmem:[%s198 + $0x248] sm:$0xff] %v463
        %718 = vst [vmem:[%s198 + $0x250] sm:$0xff] %v640
        %719 = vst [vmem:[%s198 + $0x258] sm:$0xff] %v642
        %s720 = sand.u32 %s94, 1
        %s721 = scalar_lea.sflag [#allocation4], %s720
        %s722 = sand.u32 %s94, 1
        %s723 = smul.addr %s722, 608
        %s724 = scalar_lea.vmem [#allocation7], %s723
        // Predicated region
        $region37: #{tpu_custom_call.1} parent=27 // pred_check
          %p725 = pneg %p104
        $region38: #{tpu_custom_call.1} parent=27 // pred_check_branch
          %727 = sbr.rel (%p725) target = $region40
        $region39: #{tpu_custom_call.1} parent=27 // pred_region
          %s728 = smul.u32 19, %s24
          %s729 = smul.u32 4, %s25
          %s731 = ssub.s32 9728, 9728
          %732 = vsyncadd %s721, %s731
          %s733 = smul.addr %s728, 4
          %s734 = sadd.s32 %s729, %s733
          %s735 = smul.addr %s734, 128
          %s736 = scalar_lea.hbm %s2, %s735
          %s737 = sshll.u32 %s724, 4
          %s738 = int_to_ptr.vmem [resolvable:$true] %s737
          %743 = dma.vmem_to_hbm [thread:$0]  %s738, 9728, %s736, %s721, 512, 512, 32
        $region40: #{tpu_custom_call.1} parent=27 // pred_fallthru
          _
      $region28: #{tpu_custom_call.1} parent=5 // pred_fallthru
        _
      %p744 = scmp.le.s32.totalorder 2, %s15
      // Predicated region
      $region41: #{tpu_custom_call.1} parent=5 // pred_check
        %p745 = pneg %p744
      $region42: #{tpu_custom_call.1} parent=5 // pred_check_branch
        %747 = sbr.rel (%p745) target = $region44
      $region43: #{tpu_custom_call.1} parent=5 // pred_region
        %s748 = ssub.s32 %s15, 2
        // Predicated region
        $region45: #{tpu_custom_call.1} parent=43 // pred_check
          %p749 = pneg %p110
        $region46: #{tpu_custom_call.1} parent=43 // pred_check_branch
          %751 = sbr.rel (%p749) target = $region48
        $region47: #{tpu_custom_call.1} parent=43 // pred_region
          %s752 = sand.u32 %s95, 1
          %s753 = scalar_lea.sflag [#allocation4], %s752
          %s754 = sand.u32 %s95, 1
          %s755 = smul.addr %s754, 608
          %s756 = scalar_lea.vmem [#allocation7], %s755
          %757 = dma.done %s753, 9728
        $region48: #{tpu_custom_call.1} parent=43 // pred_fallthru
          _
      $region44: #{tpu_custom_call.1} parent=5 // pred_fallthru
        _
    $region6: #{tpu_custom_call.1} parent=1 // loop_footer
      %s19 = sadd.s32 1, %s15
    $region7: #{tpu_custom_call.1} parent=1 // loop_footer_branch
      %14 = sbr.rel target = $region3
    $region8: #{tpu_custom_call.1} parent=1 // loop_exit
      _
    %758 = vsyncpa [#allocation3], 1
    %s759 = scalar_lea.sflag [#allocation3], 1
    %760 = vsyncpa %s759, 1
    %761 = vsyncpa [#allocation6], 1
    %762 = vsyncpa [#allocation4], 1
    %s763 = scalar_lea.sflag [#allocation4], 1
    %764 = vsyncpa %s763, 1

</llo_original>
